<compile_context>
chip_gen: v7x
topology: tpu7x:2x2x1
jax: 0.10.0
libtpu: 0.0.40
codegen_flags: <defaults>
</compile_context>

<pallas_src>
import jax
import jax.numpy as jnp
from jax.experimental import pallas as pl
from jax.experimental.pallas import tpu as pltpu


_LANES = 1024          # lane-dense last dim (multiple of 128)
_MAX_ROW_TILE = 512    # 512 * 1024 * 4B = 2 MiB per f32 tile


def _default_func(x):
    # The canonical Autopilot normalization lambda.
    return x * jnp.float32(1.0 / 127.5) - jnp.float32(1.0)


def _make_kernel(func):
    def kernel(x_ref, o_ref):
        # Pure VPU elementwise work, one vreg pass per tile; compute in f32.
        x = x_ref[...].astype(jnp.float32)
        o_ref[...] = func(x).astype(o_ref.dtype)
    return kernel


def lambda_layer(x: jax.Array, func=_default_func, *, out_dtype=None) -> jax.Array:
    """Applies `func(x)` elementwise via a Pallas kernel (LambdaLayer.forward).

    Works for any shape/dtype; computes in f32 and emits `out_dtype`
    (defaults to x.dtype).  Layout plumbing (flatten / reshape) is done in
    plain JAX; the kernel only sees a lane-dense (rows, 1024) slab.
    """
    out_dtype = x.dtype if out_dtype is None else out_dtype
    orig_shape = x.shape
    total = int(x.size)

    # Lane-dense 2-D view.  Pad only up to a multiple of the lane width so the
    # flat reshape is legal; the row tail is handled by grid masking instead
    # of a padding copy.
    rows = -(-total // _LANES)                       # ceil-div
    lane_padded_total = rows * _LANES

    flat = x.reshape(-1)
    if lane_padded_total != total:
        flat = jnp.pad(flat, (0, lane_padded_total - total))
    x2d = flat.reshape(rows, _LANES)

    # Tile: full extent when small (no (8,128) constraint on full-dim blocks),
    # otherwise 512 rows (multiple of 8) and let Pallas mask the partial tail.
    row_tile = rows if rows < _MAX_ROW_TILE else _MAX_ROW_TILE
    grid = (pl.cdiv(rows, row_tile),)

    out2d = pl.pallas_call(
        _make_kernel(func),
        out_shape=jax.ShapeDtypeStruct((rows, _LANES), out_dtype),
        grid_spec=pl.GridSpec(
            grid=grid,
            in_specs=[pl.BlockSpec((row_tile, _LANES), lambda i: (i, 0))],
            out_specs=pl.BlockSpec((row_tile, _LANES), lambda i: (i, 0)),
        ),
        compiler_params=pltpu.CompilerParams(
            dimension_semantics=("parallel",),
        ),
    )(x2d)

    out = out2d.reshape(-1)
    if lane_padded_total != total:
        out = out[:total]
    return out.reshape(orig_shape)


if __name__ == "__main__":
    key = jax.random.PRNGKey(0)

    # Small NCHW image batch, values in [0, 255] like raw pixels.
    x = jax.random.uniform(key, (2, 4, 16, 16), dtype=jnp.float32,
                           minval=0.0, maxval=255.0)
    y = jax.block_until_ready(lambda_layer(x))
    y_ref = x / 127.5 - 1.0
    assert y.shape == x.shape and y.dtype == x.dtype
    assert jnp.max(jnp.abs(y - y_ref)) < 1e-5

    # Ragged element count (exercises the lane-pad / tail-slice path).
    x2 = jax.random.uniform(jax.random.PRNGKey(1), (2, 3, 7, 11),
                            dtype=jnp.float32, minval=0.0, maxval=255.0)
    y2 = jax.block_until_ready(lambda_layer(x2))
    assert jnp.max(jnp.abs(y2 - (x2 / 127.5 - 1.0))) < 1e-5

    print("KERNEL_OK")
</pallas_src>

<mosaic_0001>
module attributes {stable_mosaic.version = 11 : i64} {
  func.func @kernel(%arg0: i32, %arg1: memref<2x1024xf32, #tpu.memory_space<vmem>>, %arg2: memref<2x1024xf32, #tpu.memory_space<vmem>>) attributes {dimension_semantics = [#tpu.dimension_semantics<parallel>], iteration_bounds = array<i64: 1>, scalar_prefetch = 0 : i64, scratch_operands = 0 : i64, tpu.core_type = #tpu.core_type<tc>, window_params = [{transform_indices = @transform_0, window_bounds = array<i64: 2, 1024>}, {transform_indices = @transform_1, window_bounds = array<i64: 2, 1024>}]} {
    %c0 = arith.constant 0 : index
    %c0_0 = arith.constant 0 : index
    %0 = vector.load %arg1[%c0, %c0_0] : memref<2x1024xf32, #tpu.memory_space<vmem>>, vector<2x1024xf32>
    %cst = arith.constant 0.00784313772 : f32
    %1 = vector.broadcast %cst : f32 to vector<2x1024xf32>
    %2 = arith.mulf %0, %1 : vector<2x1024xf32>
    %cst_1 = arith.constant 1.000000e+00 : f32
    %3 = vector.broadcast %cst_1 : f32 to vector<2x1024xf32>
    %4 = arith.subf %2, %3 : vector<2x1024xf32>
    %c0_2 = arith.constant 0 : index
    %c0_3 = arith.constant 0 : index
    %5 = vector.load %arg2[%c0_2, %c0_3] : memref<2x1024xf32, #tpu.memory_space<vmem>>, vector<2x1024xf32>
    tpu.vector_store %arg2[%c0_2, %c0_3], %4 {strides = array<i32>} : memref<2x1024xf32, #tpu.memory_space<vmem>>, vector<2x1024xf32>,
    return
  }
  func.func @transform_0(%arg0: i32) -> (i32, i32) {
    %c0_i32 = arith.constant 0 : i32
    %c0_i32_0 = arith.constant 0 : i32
    return %arg0, %c0_i32 : i32, i32
  }
  func.func @transform_1(%arg0: i32) -> (i32, i32) {
    %c0_i32 = arith.constant 0 : i32
    %c0_i32_0 = arith.constant 0 : i32
    return %arg0, %c0_i32 : i32, i32
  }
}

</mosaic_0001>

<llo_original>
// kernel: tpu_custom_call.1
$region0: #{tpu_custom_call.1}
  #allocation0 [shape = 'u32[]', space=smem, size = 0x4, offset = 0x4, fixed_abs, tag = 'smem constant byte address 0x4 - core index']
  #allocation1 [shape = 'u32[144,128]{1,0:T(1,128)}', space=vmem, size = 0x12000, scoped, tag = 'internal scratch']
  %s0 = inlined_call_operand.hbm [shape: f32[2,1024], index: 0, kind: input, shape index: {}]
  %s1 = inlined_call_operand.hbm [shape: f32[2,1024], index: 1, kind: output, shape index: {}]
  %s2 = sld [smem:[#allocation0]]
  $region18: #{tpu_custom_call.1} parent=0
    _
  %s4 = ssub.s32 1, %s2
  %s5 = scalar_select 0, %s4, %s2
  $region1: #{tpu_custom_call.1} parent=0
    #allocation2 [shape = 'u8[8192]{0}', space=vmem, size = 0x2000, scoped, tag = 'input window, operand 0, single buffered']
    #allocation3 [shape = 's32[1]{0}', space=sflag, size = 0x4, scoped, tag = 'scoped memory for tpu_custom_call.1']
    #allocation4 [shape = 's32[1]{0}', space=sflag, size = 0x4, scoped, tag = 'scoped memory for tpu_custom_call.1']
    #allocation5 [shape = 'u8[8192]{0}', space=vmem, size = 0x2000, scoped, tag = 'output window, operand 0, single buffered']
    %6 = vsyncpa [#allocation3], 0
    %7 = vsyncpa [#allocation4], 0
    // Predicated region
    $region2: #{tpu_custom_call.1} parent=1 // pred_check
      _
    $region3: #{tpu_custom_call.1} parent=1 // pred_check_branch
      %9 = sbr.rel (0) target = $region5
    $region4: #{tpu_custom_call.1} parent=1 // pred_region
      %s11 = ssub.s32 256, 256
      %12 = vsyncadd [#allocation3], %s11
      %s14 = sshll.u32 [#allocation2], 4
      %s15 = int_to_ptr.vmem [resolvable:$true] %s14
      %17 = dma.hbm_to_vmem [thread:$0]  %s0, 256, %s15, [#allocation3]
    $region5: #{tpu_custom_call.1} parent=1 // pred_fallthru
      _
    // Predicated region
    $region6: #{tpu_custom_call.1} parent=1 // pred_check
      _
    $region7: #{tpu_custom_call.1} parent=1 // pred_check_branch
      %19 = sbr.rel (0) target = $region9
    $region8: #{tpu_custom_call.1} parent=1 // pred_region
      %20 = dma.done [#allocation3], 256
    $region9: #{tpu_custom_call.1} parent=1 // pred_fallthru
      _
    %v21 = vld [vmem:[#allocation2] sm:$0xff]
    %v22 = vld [vmem:[#allocation2 + $0x8] sm:$0xff]
    %v23 = vmul.f32 %v21, 0.007843138
    %v24 = vmul.f32 %v22, 0.007843138
    %v25 = vsub.f32 %v23, 1.0
    %v26 = vsub.f32 %v24, 1.0
    %27 = vst [vmem:[#allocation5] sm:$0xff] %v25
    %28 = vst [vmem:[#allocation5 + $0x8] sm:$0xff] %v26
    // Predicated region
    $region10: #{tpu_custom_call.1} parent=1 // pred_check
      _
    $region11: #{tpu_custom_call.1} parent=1 // pred_check_branch
      %30 = sbr.rel (0) target = $region13
    $region12: #{tpu_custom_call.1} parent=1 // pred_region
      %s32 = ssub.s32 256, 256
      %33 = vsyncadd [#allocation4], %s32
      %s35 = sshll.u32 [#allocation5], 4
      %s36 = int_to_ptr.vmem [resolvable:$true] %s35
      %38 = dma.vmem_to_hbm [thread:$0]  %s36, 256, %s1, [#allocation4]
    $region13: #{tpu_custom_call.1} parent=1 // pred_fallthru
      _
    // Predicated region
    $region14: #{tpu_custom_call.1} parent=1 // pred_check
      _
    $region15: #{tpu_custom_call.1} parent=1 // pred_check_branch
      %40 = sbr.rel (0) target = $region17
    $region16: #{tpu_custom_call.1} parent=1 // pred_region
      %41 = dma.done [#allocation4], 256
    $region17: #{tpu_custom_call.1} parent=1 // pred_fallthru
      _
    %42 = vsyncpa [#allocation3], 1
    %43 = vsyncpa [#allocation4], 1

</llo_original>
